<compile_context>
chip_gen: v6e
topology: v6e:2x2x1
jax: 0.10.0
libtpu: 0.0.40
codegen_flags: <defaults>
</compile_context>

<pallas_src>
import functools

import jax
import jax.numpy as jnp
from jax import lax
from jax.experimental import pallas as pl
from jax.experimental.pallas import tpu as pltpu

_LANES = 128          # lane-dense slab width (native MXU tile / vreg lane count)
_ROW_B1 = 128         # weight-slab row layout (all starts are multiples of 8 -> sublane aligned)
_ROW_W2 = 136
_ROW_B2 = 264
_W_ROWS = 272


def _choose_edge_type_kernel(num_shifts, inp_ref, w_ref, out_ref):
    """Fused dual-MLP + argmax forward.

    inp_ref : (B, 128)   lane-dense [src | dest | cc | 0-pad] input slab
    w_ref   : (272, 128) packed weights:
                rows [  0,128) : w1 = [w1x || w1z] zero-padded to 128x128
                row   128      : b1 = [b1x || b1z || 0...]
                rows [136,264) : w2 = block-diag(w2x, w2z) zero-padded to 128x128
                row   264      : b2 = [b2x || b2z || 0...]
    out_ref : (B, 128) f32  x scores in lanes [0,S), z scores in [S,2S),
                            lane 126 = x argmax index, lane 127 = z argmax index (as f32 values)
    """
    S = num_shifts
    B, L = out_ref.shape

    # Static, sublane-aligned views into the single weight slab (zero-cost).
    w1 = w_ref[0:_ROW_B1, :]                      # (128, 128)
    b1 = w_ref[_ROW_B1:_ROW_B1 + 1, :]            # (1, 128)
    w2 = w_ref[_ROW_W2:_ROW_W2 + _LANES, :]       # (128, 128)
    b2 = w_ref[_ROW_B2:_ROW_B2 + 1, :]            # (1, 128)

    # Layer 1: one dense (B,128)@(128,128) MXU pass.  Padded input lanes / weight rows are
    # zero, so the fused result equals the original concat->Linear.  Elementwise stays f32.
    h = jnp.dot(inp_ref[...], w1, preferred_element_type=jnp.float32) + b1
    h = jnp.maximum(h, 0.0)                                                  # (B, 128)

    # Layer 2: block-diagonal packed second layer -> both MLPs' scores in one pass.
    # (astype is a no-op for f32 weights; enables the bf16 MXU path when packed as bf16.)
    scores = jnp.dot(h.astype(w2.dtype), w2,
                     preferred_element_type=jnp.float32) + b2                # (B, 128)

    # Fused argmax (first maximal index, matching jnp/NumPy argmax) in the idle XLU slot.
    lanes = lax.broadcasted_iota(jnp.int32, (B, L), 1)
    lanes_f = lanes.astype(jnp.float32)
    neg_inf = jnp.float32(-jnp.inf)
    big = jnp.float32(L)

    x_sc = jnp.where(lanes < S, scores, neg_inf)
    z_sc = jnp.where(jnp.logical_and(lanes >= S, lanes < 2 * S), scores, neg_inf)
    x_max = jnp.max(x_sc, axis=1, keepdims=True)
    z_max = jnp.max(z_sc, axis=1, keepdims=True)
    x_idx = jnp.min(jnp.where(x_sc == x_max, lanes_f, big), axis=1, keepdims=True)       # 0..S-1
    z_idx = jnp.min(jnp.where(z_sc == z_max, lanes_f, big), axis=1, keepdims=True) \
        - jnp.float32(S)                                                                  # 0..S-1

    # Single lane-dense output: scores + argmax indices packed into dead lanes 126/127.
    # (Lanes [2S,126) are exactly 0.0 from the zero-padded w2/b2 columns.)
    out = jnp.where(lanes == (L - 2), x_idx, scores)
    out = jnp.where(lanes == (L - 1), z_idx, out)
    out_ref[...] = out


def pack_params(params, node_hidden_size, class_conditioning_size, num_shifts,
                dtype=jnp.float32):
    """One-time host-side repack of both MLPs into a single lane-dense weight slab.

    Pass dtype=jnp.bfloat16 on v6e/v7x to halve the weight DMA (accumulation stays f32).
    """
    H = params["w1x"].shape[1]
    Din = 2 * node_hidden_size + class_conditioning_size
    S = num_shifts
    assert Din <= _LANES and 2 * H <= _LANES and 2 * S <= _LANES - 2

    slab = jnp.zeros((_W_ROWS, _LANES), jnp.float32)
    # w1 = [w1x || w1z], zero-padded to (128, 128)
    slab = slab.at[:Din, :H].set(params["w1x"])
    slab = slab.at[:Din, H:2 * H].set(params["w1z"])
    # b1 row
    slab = slab.at[_ROW_B1, :H].set(params["b1x"][0])
    slab = slab.at[_ROW_B1, H:2 * H].set(params["b1z"][0])
    # w2 = block-diag(w2x, w2z), zero-padded to (128, 128)
    slab = slab.at[_ROW_W2:_ROW_W2 + H, :S].set(params["w2x"])
    slab = slab.at[_ROW_W2 + H:_ROW_W2 + 2 * H, S:2 * S].set(params["w2z"])
    # b2 row
    slab = slab.at[_ROW_B2, :S].set(params["b2x"][0])
    slab = slab.at[_ROW_B2, S:2 * S].set(params["b2z"][0])
    return slab.astype(dtype)


def choose_edge_type_forward(src_embed, dest_embed, class_conditioning, wslab, num_shifts):
    """Single fused forward: 1 input DMA + 1 weight DMA + 1 output DMA, one pallas_call."""
    B = src_embed.shape[0]
    S = num_shifts
    half = S // 2

    # One cheap pack step producing the lane-dense input slab.
    # TODO(synk): in the autoregressive generation loop the upstream embedding producer
    # should emit this (B, 128) slab directly (and the weight slab should be kept resident
    # across steps / prefetched via a cross-pallas_call VMEM future).
    inp = jnp.concatenate([src_embed, dest_embed, class_conditioning], axis=1)
    inp_slab = jnp.pad(inp, ((0, 0), (0, _LANES - inp.shape[1]))).astype(wslab.dtype)

    kernel = functools.partial(_choose_edge_type_kernel, S)
    vmem = pl.BlockSpec(memory_space=pltpu.MemorySpace.VMEM)
    itemsize = jnp.dtype(wslab.dtype).itemsize
    cost = pl.CostEstimate(
        flops=2 * 2 * B * _LANES * _LANES,                       # two (B,128)@(128,128) matmuls
        transcendentals=0,
        bytes_accessed=int(wslab.size * itemsize + inp_slab.size * itemsize + B * _LANES * 4),
    )

    slab = pl.pallas_call(
        kernel,
        out_shape=jax.ShapeDtypeStruct((B, _LANES), jnp.float32),
        in_specs=[vmem, vmem],
        out_specs=vmem,
        cost_estimate=cost,
    )(inp_slab, wslab)

    x_scores = slab[:, :S]
    z_scores = slab[:, S:2 * S]
    x_shifts = slab[:, _LANES - 2].astype(jnp.int32) - half      # exact: indices < 128
    z_shifts = slab[:, _LANES - 1].astype(jnp.int32) - half
    # TODO(synk): initialize_edge_representation / edge_embed_module mutate a python DGL
    # LegoGraph object, force_valid masking and the training CrossEntropy bookkeeping are
    # host-side glue; no Pallas equivalent.
    return x_scores, z_scores, x_shifts, z_shifts


def init_params(key, node_hidden_size, class_conditioning_size, hidden_size, num_shifts):
    """Deterministic synthetic parameters matching the module's MLP shapes."""
    input_size = 2 * node_hidden_size + class_conditioning_size
    ks = jax.random.split(key, 8)
    s1 = 1.0 / jnp.sqrt(jnp.float32(input_size))
    s2 = 1.0 / jnp.sqrt(jnp.float32(hidden_size))
    return {
        "w1x": jax.random.uniform(ks[0], (input_size, hidden_size), jnp.float32, -s1, s1),
        "b1x": jax.random.uniform(ks[1], (1, hidden_size), jnp.float32, -s1, s1),
        "w2x": jax.random.uniform(ks[2], (hidden_size, num_shifts), jnp.float32, -s2, s2),
        "b2x": jax.random.uniform(ks[3], (1, num_shifts), jnp.float32, -s2, s2),
        "w1z": jax.random.uniform(ks[4], (input_size, hidden_size), jnp.float32, -s1, s1),
        "b1z": jax.random.uniform(ks[5], (1, hidden_size), jnp.float32, -s1, s1),
        "w2z": jax.random.uniform(ks[6], (hidden_size, num_shifts), jnp.float32, -s2, s2),
        "b2z": jax.random.uniform(ks[7], (1, num_shifts), jnp.float32, -s2, s2),
    }


if __name__ == "__main__":
    # Small, module-consistent shapes.  B >= 8 (one full f32 sublane group) per the
    # batching recommendation — one call decides 8 edges at once.
    B = 8
    node_hidden_size = 32
    class_conditioning_size = 16
    hidden_size = 32             # decision_layer_hidden_size (num_decision_layers = 2)
    num_shifts = 7

    key = jax.random.PRNGKey(0)
    k_src, k_dst, k_cc, k_par = jax.random.split(key, 4)

    src_embed = jax.random.normal(k_src, (B, node_hidden_size), jnp.float32)
    dest_embed = jax.random.normal(k_dst, (B, node_hidden_size), jnp.float32)
    class_conditioning = jax.random.normal(k_cc, (B, class_conditioning_size), jnp.float32)

    params = init_params(k_par, node_hidden_size, class_conditioning_size,
                         hidden_size, num_shifts)
    # (On v6e/v7x: pack_params(..., dtype=jnp.bfloat16) halves the weight DMA; kept f32
    # here to preserve exact numerics of the module.)
    wslab = pack_params(params, node_hidden_size, class_conditioning_size, num_shifts)

    fwd = jax.jit(choose_edge_type_forward, static_argnames=("num_shifts",))
    x_scores, z_scores, x_shifts, z_shifts = fwd(
        src_embed, dest_embed, class_conditioning, wslab, num_shifts=num_shifts)
    jax.block_until_ready((x_scores, z_scores, x_shifts, z_shifts))

    # Pure-JAX reference (original, unfused formulation).
    inp = jnp.concatenate([src_embed, dest_embed, class_conditioning], axis=1)
    ref_x = jnp.maximum(inp @ params["w1x"] + params["b1x"], 0.0) @ params["w2x"] + params["b2x"]
    ref_z = jnp.maximum(inp @ params["w1z"] + params["b1z"], 0.0) @ params["w2z"] + params["b2z"]
    half = num_shifts // 2
    ref_xs = jnp.argmax(ref_x, axis=1).astype(jnp.int32) - half
    ref_zs = jnp.argmax(ref_z, axis=1).astype(jnp.int32) - half

    assert jnp.allclose(x_scores, ref_x, atol=1e-4, rtol=1e-4)
    assert jnp.allclose(z_scores, ref_z, atol=1e-4, rtol=1e-4)
    assert jnp.array_equal(x_shifts, ref_xs)
    assert jnp.array_equal(z_shifts, ref_zs)

    print("KERNEL_OK")
</pallas_src>

<mosaic_0001>
module attributes {stable_mosaic.version = 11 : i64} {
  func.func @_choose_edge_type_kernel(%arg0: memref<8x128xf32, #tpu.memory_space<vmem>>, %arg1: memref<272x128xf32, #tpu.memory_space<vmem>>, %arg2: memref<8x128xf32, #tpu.memory_space<vmem>>) attributes {dimension_semantics = [], scalar_prefetch = 0 : i64, scratch_operands = 0 : i64, tpu.core_type = #tpu.core_type<tc>} {
    %c0 = arith.constant 0 : index
    %c0_0 = arith.constant 0 : index
    %0 = vector.load %arg1[%c0, %c0_0] : memref<272x128xf32, #tpu.memory_space<vmem>>, vector<128x128xf32>
    %c128 = arith.constant 128 : index
    %c0_1 = arith.constant 0 : index
    %1 = vector.load %arg1[%c128, %c0_1] : memref<272x128xf32, #tpu.memory_space<vmem>>, vector<1x128xf32>
    %c136 = arith.constant 136 : index
    %c0_2 = arith.constant 0 : index
    %2 = vector.load %arg1[%c136, %c0_2] : memref<272x128xf32, #tpu.memory_space<vmem>>, vector<128x128xf32>
    %c264 = arith.constant 264 : index
    %c0_3 = arith.constant 0 : index
    %3 = vector.load %arg1[%c264, %c0_3] : memref<272x128xf32, #tpu.memory_space<vmem>>, vector<1x128xf32>
    %c0_4 = arith.constant 0 : index
    %c0_5 = arith.constant 0 : index
    %4 = vector.load %arg0[%c0_4, %c0_5] : memref<8x128xf32, #tpu.memory_space<vmem>>, vector<8x128xf32>
    %cst = arith.constant dense<0.000000e+00> : vector<8x128xf32>
    %5 = tpu.matmul %4, %0, %cst {dimension_numbers = #tpu.dot_dimension_numbers<[1], [0], [0], [1], [0, 0, 1, 1], [], []>} : vector<8x128xf32>, vector<128x128xf32>, vector<8x128xf32> -> vector<8x128xf32>
    %6 = vector.broadcast %1 : vector<1x128xf32> to vector<8x128xf32>
    %7 = arith.addf %5, %6 : vector<8x128xf32>
    %cst_6 = arith.constant 0.000000e+00 : f32
    %8 = vector.broadcast %cst_6 : f32 to vector<8x128xf32>
    %9 = arith.maximumf %7, %8 : vector<8x128xf32>
    %cst_7 = arith.constant dense<0.000000e+00> : vector<8x128xf32>
    %10 = tpu.matmul %9, %2, %cst_7 {dimension_numbers = #tpu.dot_dimension_numbers<[1], [0], [0], [1], [0, 0, 1, 1], [], []>} : vector<8x128xf32>, vector<128x128xf32>, vector<8x128xf32> -> vector<8x128xf32>
    %11 = vector.broadcast %3 : vector<1x128xf32> to vector<8x128xf32>
    %12 = arith.addf %10, %11 : vector<8x128xf32>
    %13 = tpu.iota {dimensions = array<i32: 1>} : vector<8x128xi32>
    %14 = arith.sitofp %13 : vector<8x128xi32> to vector<8x128xf32>
    %c7_i32 = arith.constant 7 : i32
    %15 = vector.broadcast %c7_i32 : i32 to vector<8x128xi32>
    %16 = arith.cmpi slt, %13, %15 : vector<8x128xi32>
    %cst_8 = arith.constant 0xFF800000 : f32
    %17 = vector.broadcast %cst_8 : f32 to vector<8x128xf32>
    %18 = arith.select %16, %12, %17 : vector<8x128xi1>, vector<8x128xf32>
    %c7_i32_9 = arith.constant 7 : i32
    %19 = vector.broadcast %c7_i32_9 : i32 to vector<8x128xi32>
    %20 = arith.cmpi sge, %13, %19 : vector<8x128xi32>
    %c14_i32 = arith.constant 14 : i32
    %21 = vector.broadcast %c14_i32 : i32 to vector<8x128xi32>
    %22 = arith.cmpi slt, %13, %21 : vector<8x128xi32>
    %23 = arith.andi %20, %22 : vector<8x128xi1>
    %cst_10 = arith.constant 0xFF800000 : f32
    %24 = vector.broadcast %cst_10 : f32 to vector<8x128xf32>
    %25 = arith.select %23, %12, %24 : vector<8x128xi1>, vector<8x128xf32>
    %cst_11 = arith.constant dense<0xFF800000> : vector<8xf32>
    %26 = vector.multi_reduction <maximumf>, %18, %cst_11 [1] : vector<8x128xf32> to vector<8xf32>
    %27 = vector.shape_cast %26 : vector<8xf32> to vector<8x1xf32>
    %cst_12 = arith.constant dense<0xFF800000> : vector<8xf32>
    %28 = vector.multi_reduction <maximumf>, %25, %cst_12 [1] : vector<8x128xf32> to vector<8xf32>
    %29 = vector.shape_cast %28 : vector<8xf32> to vector<8x1xf32>
    %30 = vector.broadcast %27 : vector<8x1xf32> to vector<8x128xf32>
    %31 = arith.cmpf oeq, %18, %30 : vector<8x128xf32>
    %cst_13 = arith.constant 1.280000e+02 : f32
    %32 = vector.broadcast %cst_13 : f32 to vector<8x128xf32>
    %33 = arith.select %31, %14, %32 : vector<8x128xi1>, vector<8x128xf32>
    %cst_14 = arith.constant dense<0x7F800000> : vector<8xf32>
    %34 = vector.multi_reduction <minimumf>, %33, %cst_14 [1] : vector<8x128xf32> to vector<8xf32>
    %35 = vector.shape_cast %34 : vector<8xf32> to vector<8x1xf32>
    %36 = vector.broadcast %29 : vector<8x1xf32> to vector<8x128xf32>
    %37 = arith.cmpf oeq, %25, %36 : vector<8x128xf32>
    %cst_15 = arith.constant 1.280000e+02 : f32
    %38 = vector.broadcast %cst_15 : f32 to vector<8x128xf32>
    %39 = arith.select %37, %14, %38 : vector<8x128xi1>, vector<8x128xf32>
    %cst_16 = arith.constant dense<0x7F800000> : vector<8xf32>
    %40 = vector.multi_reduction <minimumf>, %39, %cst_16 [1] : vector<8x128xf32> to vector<8xf32>
    %41 = vector.shape_cast %40 : vector<8xf32> to vector<8x1xf32>
    %cst_17 = arith.constant 7.000000e+00 : f32
    %42 = vector.broadcast %cst_17 : f32 to vector<8x1xf32>
    %43 = arith.subf %41, %42 : vector<8x1xf32>
    %c126_i32 = arith.constant 126 : i32
    %44 = vector.broadcast %c126_i32 : i32 to vector<8x128xi32>
    %45 = arith.cmpi eq, %13, %44 : vector<8x128xi32>
    %46 = vector.shape_cast %35 : vector<8x1xf32> to vector<8x1xf32>
    %47 = vector.broadcast %46 : vector<8x1xf32> to vector<8x128xf32>
    %48 = arith.select %45, %47, %12 : vector<8x128xi1>, vector<8x128xf32>
    %c127_i32 = arith.constant 127 : i32
    %49 = vector.broadcast %c127_i32 : i32 to vector<8x128xi32>
    %50 = arith.cmpi eq, %13, %49 : vector<8x128xi32>
    %51 = vector.shape_cast %43 : vector<8x1xf32> to vector<8x1xf32>
    %52 = vector.broadcast %51 : vector<8x1xf32> to vector<8x128xf32>
    %53 = arith.select %50, %52, %48 : vector<8x128xi1>, vector<8x128xf32>
    %c0_18 = arith.constant 0 : index
    %c0_19 = arith.constant 0 : index
    %54 = vector.load %arg2[%c0_18, %c0_19] : memref<8x128xf32, #tpu.memory_space<vmem>>, vector<8x128xf32>
    tpu.vector_store %arg2[%c0_18, %c0_19], %53 {strides = array<i32>} : memref<8x128xf32, #tpu.memory_space<vmem>>, vector<8x128xf32>,
    return
  }
}

</mosaic_0001>

<llo_original>
// kernel: choose_edge_type_forward.1
$region0: #{choose_edge_type_forward.1}
  #allocation0 [shape = 'u32[]', space=smem, size = 0x4, offset = 0x4, fixed_abs, tag = 'smem constant byte address 0x4 - core index']
  #allocation1 [shape = 'u32[144,128]{1,0:T(1,128)}', space=vmem, size = 0x12000, scoped, tag = 'internal scratch']
  %s0 = inlined_call_operand.vmem [shape: f32[8,128], index: 0, kind: input, shape index: {}]
  %s1 = inlined_call_operand.hbm [shape: f32[272,128], index: 1, kind: input, shape index: {}]
  %s2 = inlined_call_operand.vmem [shape: f32[8,128], index: 2, kind: output, shape index: {}]
  %s3 = sld [smem:[#allocation0]]
  $region22: #{choose_edge_type_forward.1} parent=0
    _
  %s5 = ssub.s32 1, %s3
  %s6 = scalar_select 0, %s5, %s3
  $region1: #{choose_edge_type_forward.1} parent=0
    #allocation2 [shape = 'u8[139264]{0}', space=vmem, size = 0x22000, scoped, tag = 'input window, operand 1, single buffered']
    #allocation3 [shape = 's32[1]{0}', space=sflag, size = 0x4, scoped, tag = 'scoped memory for choose_edge_type_forward.1']
    %7 = vsyncpa [#allocation3], 0
    // Predicated region
    $region2: #{choose_edge_type_forward.1} parent=1 // pred_check
      _
    $region3: #{choose_edge_type_forward.1} parent=1 // pred_check_branch
      %9 = sbr.rel (0) target = $region5
    $region4: #{choose_edge_type_forward.1} parent=1 // pred_region
      _
    $region5: #{choose_edge_type_forward.1} parent=1 // pred_fallthru
      _
    // Predicated region
    $region6: #{choose_edge_type_forward.1} parent=1 // pred_check
      _
    $region7: #{choose_edge_type_forward.1} parent=1 // pred_check_branch
      %11 = sbr.rel (0) target = $region9
    $region8: #{choose_edge_type_forward.1} parent=1 // pred_region
      %s13 = ssub.s32 4352, 4352
      %14 = vsyncadd [#allocation3], %s13
      %s15 = sshll.u32 [#allocation2], 4
      %s16 = int_to_ptr.vmem [resolvable:$true] %s15
      %21 = dma.hbm_to_vmem [thread:$0]  %s1, 4352, %s16, [#allocation3], 128, 128, 8
    $region9: #{choose_edge_type_forward.1} parent=1 // pred_fallthru
      _
    // Predicated region
    $region10: #{choose_edge_type_forward.1} parent=1 // pred_check
      _
    $region11: #{choose_edge_type_forward.1} parent=1 // pred_check_branch
      %23 = sbr.rel (0) target = $region13
    $region12: #{choose_edge_type_forward.1} parent=1 // pred_region
      %24 = dma.done [#allocation3], 4352
    $region13: #{choose_edge_type_forward.1} parent=1 // pred_fallthru
      _
    %v25 = vld [vmem:[#allocation2] sm:$0xff]
    %v26 = vld [vmem:[#allocation2 + $0x8] sm:$0xff]
    %v27 = vld [vmem:[#allocation2 + $0x10] sm:$0xff]
    %v28 = vld [vmem:[#allocation2 + $0x18] sm:$0xff]
    %v29 = vld [vmem:[#allocation2 + $0x20] sm:$0xff]
    %v30 = vld [vmem:[#allocation2 + $0x28] sm:$0xff]
    %v31 = vld [vmem:[#allocation2 + $0x30] sm:$0xff]
    %v32 = vld [vmem:[#allocation2 + $0x38] sm:$0xff]
    %v33 = vld [vmem:[#allocation2 + $0x40] sm:$0xff]
    %v34 = vld [vmem:[#allocation2 + $0x48] sm:$0xff]
    %v35 = vld [vmem:[#allocation2 + $0x50] sm:$0xff]
    %v36 = vld [vmem:[#allocation2 + $0x58] sm:$0xff]
    %v37 = vld [vmem:[#allocation2 + $0x60] sm:$0xff]
    %v38 = vld [vmem:[#allocation2 + $0x68] sm:$0xff]
    %v39 = vld [vmem:[#allocation2 + $0x70] sm:$0xff]
    %v40 = vld [vmem:[#allocation2 + $0x78] sm:$0xff]
    %v41 = vld [vmem:[#allocation2 + $0x80] sm:$0x1]
    %v42 = vld [vmem:[#allocation2 + $0x88] sm:$0xff]
    %v43 = vld [vmem:[#allocation2 + $0x90] sm:$0xff]
    %v44 = vld [vmem:[#allocation2 + $0x98] sm:$0xff]
    %v45 = vld [vmem:[#allocation2 + $0xa0] sm:$0xff]
    %v46 = vld [vmem:[#allocation2 + $0xa8] sm:$0xff]
    %v47 = vld [vmem:[#allocation2 + $0xb0] sm:$0xff]
    %v48 = vld [vmem:[#allocation2 + $0xb8] sm:$0xff]
    %v49 = vld [vmem:[#allocation2 + $0xc0] sm:$0xff]
    %v50 = vld [vmem:[#allocation2 + $0xc8] sm:$0xff]
    %v51 = vld [vmem:[#allocation2 + $0xd0] sm:$0xff]
    %v52 = vld [vmem:[#allocation2 + $0xd8] sm:$0xff]
    %v53 = vld [vmem:[#allocation2 + $0xe0] sm:$0xff]
    %v54 = vld [vmem:[#allocation2 + $0xe8] sm:$0xff]
    %v55 = vld [vmem:[#allocation2 + $0xf0] sm:$0xff]
    %v56 = vld [vmem:[#allocation2 + $0xf8] sm:$0xff]
    %v57 = vld [vmem:[#allocation2 + $0x100] sm:$0xff]
    %v58 = vld [vmem:[#allocation2 + $0x108] sm:$0x1]
    %v59 = vld [vmem:[%s0] sm:$0xff]
    %v60 = vlaneseq
    %v61 = vshrl.u32 %v60, 7
    %v62 = vsub.s32 0, %v61
    %v63 = vrot.slane %v41, %v62
    %64 = vmatprep.subr.mxu0 0.0
    %65 = vmatpush1.msra.mxu0 %v40
    %66 = vmatprep.subr.mxu0 0.0
    %67 = vmatpush1.msra.mxu0 %v39
    %68 = vmatprep.subr.mxu0 0.0
    %69 = vmatpush1.msra.mxu0 %v38
    %70 = vmatprep.subr.mxu0 0.0
    %71 = vmatpush1.msra.mxu0 %v37
    %72 = vmatprep.subr.mxu0 0.0
    %73 = vmatpush1.msra.mxu0 %v36
    %74 = vmatprep.subr.mxu0 0.0
    %75 = vmatpush1.msra.mxu0 %v35
    %76 = vmatprep.subr.mxu0 0.0
    %77 = vmatpush1.msra.mxu0 %v34
    %78 = vmatprep.subr.mxu0 0.0
    %79 = vmatpush1.msra.mxu0 %v33
    %80 = vmatprep.subr.mxu0 0.0
    %81 = vmatpush1.msra.mxu0 %v32
    %82 = vmatprep.subr.mxu0 0.0
    %83 = vmatpush1.msra.mxu0 %v31
    %84 = vmatprep.subr.mxu0 0.0
    %85 = vmatpush1.msra.mxu0 %v30
    %86 = vmatprep.subr.mxu0 0.0
    %87 = vmatpush1.msra.mxu0 %v29
    %88 = vmatprep.subr.mxu0 0.0
    %89 = vmatpush1.msra.mxu0 %v28
    %90 = vmatprep.subr.mxu0 0.0
    %91 = vmatpush1.msra.mxu0 %v27
    %92 = vmatprep.subr.mxu0 0.0
    %93 = vmatpush1.msra.mxu0 %v26
    %94 = vmatprep.subr.mxu0 0.0
    %95 = vmatpush1.msra.mxu0 %v25
    %96 = vmatprep.subr.mxu0 0.0
    %97 = vmatpush2.msra.mxu0 0.0
    %98 = vmatprep.subr.mxu0 0.0
    %99 = vmatpush2.msra.mxu0 0.0
    %100 = vmatprep.subr.mxu0 0.0
    %101 = vmatpush2.msra.mxu0 0.0
    %102 = vmatprep.subr.mxu0 0.0
    %103 = vmatpush2.msra.mxu0 0.0
    %104 = vmatprep.subr.mxu0 0.0
    %105 = vmatpush2.msra.mxu0 0.0
    %106 = vmatprep.subr.mxu0 0.0
    %107 = vmatpush2.msra.mxu0 0.0
    %108 = vmatprep.subr.mxu0 0.0
    %109 = vmatpush2.msra.mxu0 0.0
    %110 = vmatprep.subr.mxu0 0.0
    %111 = vmatpush2.msra.mxu0 0.0
    %112 = vmatprep.subr.mxu0 0.0
    %113 = vmatpush2.msra.mxu0 0.0
    %114 = vmatprep.subr.mxu0 0.0
    %115 = vmatpush2.msra.mxu0 0.0
    %116 = vmatprep.subr.mxu0 0.0
    %117 = vmatpush2.msra.mxu0 0.0
    %118 = vmatprep.subr.mxu0 0.0
    %119 = vmatpush2.msra.mxu0 0.0
    %120 = vmatprep.subr.mxu0 0.0
    %121 = vmatpush2.msra.mxu0 0.0
    %122 = vmatprep.subr.mxu0 0.0
    %123 = vmatpush2.msra.mxu0 0.0
    %124 = vmatprep.subr.mxu0 0.0
    %125 = vmatpush2.msra.mxu0 0.0
    %126 = vmatprep.subr.mxu0 0.0
    %127 = vmatpush2.msra.mxu0 0.0
    %128 = vmatprep.mubr.f32.mxu0 0.0
    %129 = vmatmul.mubr.f32.gmra.mxu0 %v59
    %v130 = vpop.f32.mrf.mxu0
    %v131 = vadd.f32 %v63, %v130
    %v132 = vpop.f32.mrf.mxu0
    %133 = vdwg.mxu0
    %v134 = vmax.f32 %v131, 0.0
    %v135 = vlaneseq
    %v136 = vshrl.u32 %v135, 7
    %v137 = vsub.s32 0, %v136
    %v138 = vrot.slane %v58, %v137
    %139 = vmatprep.subr.mxu0 0.0
    %140 = vmatpush1.msra.mxu0 %v57
    %141 = vmatprep.subr.mxu0 0.0
    %142 = vmatpush1.msra.mxu0 %v56
    %143 = vmatprep.subr.mxu0 0.0
    %144 = vmatpush1.msra.mxu0 %v55
    %145 = vmatprep.subr.mxu0 0.0
    %146 = vmatpush1.msra.mxu0 %v54
    %147 = vmatprep.subr.mxu0 0.0
    %148 = vmatpush1.msra.mxu0 %v53
    %149 = vmatprep.subr.mxu0 0.0
    %150 = vmatpush1.msra.mxu0 %v52
    %151 = vmatprep.subr.mxu0 0.0
    %152 = vmatpush1.msra.mxu0 %v51
    %153 = vmatprep.subr.mxu0 0.0
    %154 = vmatpush1.msra.mxu0 %v50
    %155 = vmatprep.subr.mxu0 0.0
    %156 = vmatpush1.msra.mxu0 %v49
    %157 = vmatprep.subr.mxu0 0.0
    %158 = vmatpush1.msra.mxu0 %v48
    %159 = vmatprep.subr.mxu0 0.0
    %160 = vmatpush1.msra.mxu0 %v47
    %161 = vmatprep.subr.mxu0 0.0
    %162 = vmatpush1.msra.mxu0 %v46
    %163 = vmatprep.subr.mxu0 0.0
    %164 = vmatpush1.msra.mxu0 %v45
    %165 = vmatprep.subr.mxu0 0.0
    %166 = vmatpush1.msra.mxu0 %v44
    %167 = vmatprep.subr.mxu0 0.0
    %168 = vmatpush1.msra.mxu0 %v43
    %169 = vmatprep.subr.mxu0 0.0
    %170 = vmatpush1.msra.mxu0 %v42
    %171 = vmatprep.subr.mxu0 0.0
    %172 = vmatpush2.msra.mxu0 0.0
    %173 = vmatprep.subr.mxu0 0.0
    %174 = vmatpush2.msra.mxu0 0.0
    %175 = vmatprep.subr.mxu0 0.0
    %176 = vmatpush2.msra.mxu0 0.0
    %177 = vmatprep.subr.mxu0 0.0
    %178 = vmatpush2.msra.mxu0 0.0
    %179 = vmatprep.subr.mxu0 0.0
    %180 = vmatpush2.msra.mxu0 0.0
    %181 = vmatprep.subr.mxu0 0.0
    %182 = vmatpush2.msra.mxu0 0.0
    %183 = vmatprep.subr.mxu0 0.0
    %184 = vmatpush2.msra.mxu0 0.0
    %185 = vmatprep.subr.mxu0 0.0
    %186 = vmatpush2.msra.mxu0 0.0
    %187 = vmatprep.subr.mxu0 0.0
    %188 = vmatpush2.msra.mxu0 0.0
    %189 = vmatprep.subr.mxu0 0.0
    %190 = vmatpush2.msra.mxu0 0.0
    %191 = vmatprep.subr.mxu0 0.0
    %192 = vmatpush2.msra.mxu0 0.0
    %193 = vmatprep.subr.mxu0 0.0
    %194 = vmatpush2.msra.mxu0 0.0
    %195 = vmatprep.subr.mxu0 0.0
    %196 = vmatpush2.msra.mxu0 0.0
    %197 = vmatprep.subr.mxu0 0.0
    %198 = vmatpush2.msra.mxu0 0.0
    %199 = vmatprep.subr.mxu0 0.0
    %200 = vmatpush2.msra.mxu0 0.0
    %201 = vmatprep.subr.mxu0 0.0
    %202 = vmatpush2.msra.mxu0 0.0
    %203 = vmatprep.mubr.f32.mxu0 0.0
    %204 = vmatmul.mubr.f32.gmra.mxu0 %v134
    %v205 = vpop.f32.mrf.mxu0
    %v206 = vadd.f32 %v138, %v205
    %v207 = vpop.f32.mrf.mxu0
    %208 = vdwg.mxu0
    %v209 = vlaneseq
    %v210 = vand.u32 %v209, 127
    %v211 = vcvt.s32.f32 %v210
    %vm212 = vcmp.lt.s32.totalorder %v210, 7
    %v213 = vsel %vm212, %v206, -inf
    %vm214 = vcmp.ge.s32.totalorder %v210, 7
    %vm215 = vcmp.lt.s32.totalorder %v210, 14
    %vm216 = vmand %vm214, %vm215
    %v217 = vsel %vm216, %v206, -inf
    %218 = vmax.xlane.f32.xlu0 %v213
    %v219 = vpop.xlane.xlu0 %218
    %220 = vmax.xlane.f32.xlu0 %v217
    %v221 = vpop.xlane.xlu0 %220
    %vm222 = vcmp.eq.f32.partialorder %v213, %v219
    %v223 = vsel %vm222, %v211, 128.0
    %224 = vmin.xlane.f32.xlu0 %v223
    %v225 = vpop.xlane.xlu0 %224
    %vm226 = vcmp.eq.f32.partialorder %v217, %v221
    %v227 = vsel %vm226, %v211, 128.0
    %228 = vmin.xlane.f32.xlu0 %v227
    %v229 = vpop.xlane.xlu0 %228
    %v230 = vsub.f32 %v229, 7.0
    %vm231 = vcmp.eq.s32.totalorder %v210, 126
    %v232 = vsel %vm231, %v225, %v206
    %vm233 = vcmp.eq.s32.totalorder %v210, 127
    %v234 = vsel %vm233, %v230, %v232
    %235 = vst [vmem:[%s2] sm:$0xff] %v234
    // Predicated region
    $region14: #{choose_edge_type_forward.1} parent=1 // pred_check
      _
    $region15: #{choose_edge_type_forward.1} parent=1 // pred_check_branch
      %237 = sbr.rel (0) target = $region17
    $region16: #{choose_edge_type_forward.1} parent=1 // pred_region
      _
    $region17: #{choose_edge_type_forward.1} parent=1 // pred_fallthru
      _
    // Predicated region
    $region18: #{choose_edge_type_forward.1} parent=1 // pred_check
      _
    $region19: #{choose_edge_type_forward.1} parent=1 // pred_check_branch
      %239 = sbr.rel (0) target = $region21
    $region20: #{choose_edge_type_forward.1} parent=1 // pred_region
      _
    $region21: #{choose_edge_type_forward.1} parent=1 // pred_fallthru
      _
    %240 = vsyncpa [#allocation3], 1

</llo_original>
